<compile_context>
chip_gen: v7x
topology: tpu7x:2x2x1
jax: 0.10.0
libtpu: 0.0.40
codegen_flags: <defaults>
</compile_context>

<pallas_src>
import functools

import jax
import jax.numpy as jnp
from jax import lax
from jax.experimental import pallas as pl
from jax.experimental.pallas import tpu as pltpu

_LANE = 128          # lane width
_BLK_ROWS = 512      # sublanes per grid step (multiple of 32 for int8 tiles)
_BLK = _BLK_ROWS * _LANE   # edges handled per grid step (64K)


def _bernoulli_mask_kernel(bits_ref, mask_ref, *, threshold, num_edges):
    """int8 Bernoulli(p) mask from pre-generated uniform random bits.

    mask[i] = 1  iff  (bits[i] >> 8) < threshold  (threshold = p * 2^24),
    with the padded tail (flat index >= num_edges) forced to 0.
    """
    i = pl.program_id(0)
    last = pl.num_programs(0) - 1

    bits = bits_ref[...]                                   # uint32 (ROWS, LANE)
    u24 = (bits >> 8).astype(jnp.int32)                    # uniform in [0, 2^24)
    m = (u24 < jnp.int32(threshold)).astype(jnp.int8)

    @pl.when(i != last)
    def _():
        mask_ref[...] = m

    @pl.when(i == last)
    def _():
        # Tail-validity masking only on the last block.
        r = lax.broadcasted_iota(jnp.int32, (_BLK_ROWS, _LANE), 0)
        c = lax.broadcasted_iota(jnp.int32, (_BLK_ROWS, _LANE), 1)
        flat = i * _BLK + r * _LANE + c
        mask_ref[...] = jnp.where(flat < num_edges, m, jnp.int8(0))


def bernoulli_edge_mask(key, num_edges, p):
    """Returns the per-edge int8 Bernoulli(p) mask of shape (num_edges,)."""
    n_rows = max(1, (num_edges + _LANE - 1) // _LANE)
    n_blk = (n_rows + _BLK_ROWS - 1) // _BLK_ROWS
    n_rows_pad = n_blk * _BLK_ROWS

    # TODO(synk): on real TPU the bits could be generated in-kernel with
    # pltpu.prng_seed / prng_random_bits (saves one HBM read of 4 bytes/edge),
    # but those primitives do not lower in Pallas interpret mode.
    bits = jax.random.bits(key, (n_rows_pad, _LANE), dtype=jnp.uint32)
    threshold = int(round(p * float(1 << 24)))

    kernel = functools.partial(
        _bernoulli_mask_kernel, threshold=threshold, num_edges=num_edges)
    mask2d = pl.pallas_call(
        kernel,
        grid=(n_blk,),
        in_specs=[pl.BlockSpec((_BLK_ROWS, _LANE), lambda i: (i, 0))],
        out_specs=pl.BlockSpec((_BLK_ROWS, _LANE), lambda i: (i, 0)),
        out_shape=jax.ShapeDtypeStruct((n_rows_pad, _LANE), jnp.int8),
        compiler_params=pltpu.CompilerParams(
            dimension_semantics=("parallel",)),
    )(bits)
    return mask2d.reshape(-1)[:num_edges]


def mask_edge(edge_index, p, key):
    """Pallas version of lrgae.masks.mask_edge.

    Returns (remaining_edges, masked_edges, num_remaining, num_masked) where
    the edge arrays are (2, E) int32 padded with -1 past the valid count.
    """
    if p < 0.0 or p > 1.0:
        raise ValueError(f"Mask probability has to be between 0 and 1 (got {p})")
    E = edge_index.shape[1]
    mask_i8 = bernoulli_edge_mask(key, E, p)
    m = mask_i8.astype(jnp.int32)

    idx = jnp.arange(E, dtype=jnp.int32)
    cum_m = jnp.cumsum(m)                    # masked edges up to & incl. i
    num_masked = cum_m[-1]
    num_rem = E - num_masked

    # Cumsum-based stable partition (remaining first, masked after):
    pos_msk = cum_m - 1                      # stable rank among masked edges
    pos_rem = idx - cum_m                    # stable rank among remaining edges
    dest = jnp.where(m == 1, num_rem + pos_msk, pos_rem)
    order = jnp.zeros((E,), jnp.int32).at[dest].set(idx)
    part = edge_index[:, order]              # single gather

    remaining = jnp.where(idx[None, :] < num_rem, part, -1)
    masked_shift = jnp.roll(part, -num_rem, axis=1)
    masked = jnp.where(idx[None, :] < num_masked, masked_shift, -1)
    return remaining, masked, num_rem, num_masked


def to_undirected(edges, num_valid):
    """Interleave edges with their reverse so valid columns stay contiguous."""
    rev = edges[::-1, :]
    und = jnp.stack([edges, rev], axis=2).reshape(2, -1)   # e0, r0, e1, r1, ...
    # TODO(synk): PyG's to_undirected also coalesces (sorts + removes duplicate
    # edges); duplicate removal is dynamic-shape and is not reproduced here.
    return und, 2 * num_valid


class MaskEdge:
    """JAX/Pallas equivalent of lrgae.masks.MaskEdge.

    Graph objects are plain dicts with keys 'edge_index', 'edge_count',
    'masked_edges', 'masked_count' (+ passthrough of other fields in `data`).
    """

    def __init__(self, p: float = 0.7, undirected: bool = True):
        if p < 0.0 or p > 1.0:
            raise ValueError(f"Mask probability has to be between 0 and 1 (got {p})")
        self.p = p
        self.undirected = undirected

    def __call__(self, data, key):
        edge_index = data["edge_index"]
        remaining_edges, masked_edges, n_rem, n_msk = mask_edge(
            edge_index, p=self.p, key=key)

        remaining_graph = dict(data)
        masked_graph = dict(data)
        remaining_graph["masked_edges"] = masked_edges
        remaining_graph["masked_count"] = n_msk
        masked_graph["masked_edges"] = remaining_edges
        masked_graph["masked_count"] = n_rem

        if self.undirected:
            remaining_edges, n_rem = to_undirected(remaining_edges, n_rem)
            masked_edges, n_msk = to_undirected(masked_edges, n_msk)

        masked_graph["edge_index"] = masked_edges
        masked_graph["edge_count"] = n_msk
        remaining_graph["edge_index"] = remaining_edges
        remaining_graph["edge_count"] = n_rem
        return remaining_graph, masked_graph

    def extra_repr(self):
        return f"p={self.p}, undirected={self.undirected}"


if __name__ == "__main__":
    import numpy as np

    key = jax.random.PRNGKey(0)
    k_src, k_dst, k_mask = jax.random.split(key, 3)

    num_nodes, num_edges = 16, 100
    src = jax.random.randint(k_src, (num_edges,), 0, num_nodes, dtype=jnp.int32)
    dst = jax.random.randint(k_dst, (num_edges,), 0, num_nodes, dtype=jnp.int32)
    edge_index = jnp.stack([src, dst], axis=0)          # (2, 100) int32

    data = {"edge_index": edge_index}
    module = MaskEdge(p=0.7, undirected=True)

    remaining_graph, masked_graph = module(data, k_mask)
    jax.block_until_ready(remaining_graph["edge_index"])
    jax.block_until_ready(masked_graph["edge_index"])

    # Sanity checks on shapes / counts.
    n_msk = int(remaining_graph["masked_count"])   # masked (directed) edges
    n_rem = int(masked_graph["masked_count"])      # remaining (directed) edges
    assert n_rem + n_msk == num_edges
    assert remaining_graph["edge_index"].shape == (2, 2 * num_edges)
    assert masked_graph["edge_index"].shape == (2, 2 * num_edges)
    assert int(remaining_graph["edge_count"]) == 2 * n_rem
    assert int(masked_graph["edge_count"]) == 2 * n_msk

    # The directed partition must be a column-permutation of the original edges.
    rem_dir = np.asarray(masked_graph["masked_edges"])[:, :n_rem]
    msk_dir = np.asarray(remaining_graph["masked_edges"])[:, :n_msk]
    recombined = np.concatenate([rem_dir, msk_dir], axis=1)
    orig = np.asarray(edge_index)
    assert np.array_equal(
        recombined[:, np.lexsort(recombined)], orig[:, np.lexsort(orig)])

    # Padding columns of the undirected outputs stay -1 and are contiguous.
    assert np.all(np.asarray(remaining_graph["edge_index"])[:, 2 * n_rem:] == -1)
    assert np.all(np.asarray(masked_graph["edge_index"])[:, 2 * n_msk:] == -1)

    print("KERNEL_OK")
</pallas_src>

<mosaic_0001>
module attributes {stable_mosaic.version = 11 : i64} {
  func.func @_bernoulli_mask_kernel(%arg0: i32, %arg1: memref<512x128xi32, #tpu.memory_space<vmem>>, %arg2: memref<512x128xi8, #tpu.memory_space<vmem>>) attributes {dimension_semantics = [#tpu.dimension_semantics<parallel>], iteration_bounds = array<i64: 1>, scalar_prefetch = 0 : i64, scratch_operands = 0 : i64, tpu.core_type = #tpu.core_type<tc>, window_params = [{transform_indices = @transform_0, window_bounds = array<i64: 512, 128>}, {transform_indices = @transform_1, window_bounds = array<i64: 512, 128>}]} {
    %c0 = arith.constant 0 : index
    %c0_0 = arith.constant 0 : index
    %0 = vector.load %arg1[%c0, %c0_0] : memref<512x128xi32, #tpu.memory_space<vmem>>, vector<512x128xi32>
    %c8_i32 = arith.constant 8 : i32
    %1 = vector.broadcast %c8_i32 : i32 to vector<512x128xi32>
    %2 = arith.shrui %0, %1 : vector<512x128xi32>
    %c11744051_i32 = arith.constant 11744051 : i32
    %3 = vector.broadcast %c11744051_i32 : i32 to vector<512x128xi32>
    %4 = arith.cmpi slt, %2, %3 : vector<512x128xi32>
    %5 = arith.extui %4 : vector<512x128xi1> to vector<512x128xi8>
    %c0_i32 = arith.constant 0 : i32
    %6 = arith.cmpi ne, %arg0, %c0_i32 : i32
    %7 = arith.extui %6 : i1 to i32
    %c0_i32_1 = arith.constant 0 : i32
    %8 = arith.cmpi ne, %7, %c0_i32_1 : i32
    scf.if %8 {
      %c0_4 = arith.constant 0 : index
      %c0_5 = arith.constant 0 : index
      %12 = vector.load %arg2[%c0_4, %c0_5] : memref<512x128xi8, #tpu.memory_space<vmem>>, vector<512x128xi8>
      tpu.vector_store %arg2[%c0_4, %c0_5], %5 {strides = array<i32>} : memref<512x128xi8, #tpu.memory_space<vmem>>, vector<512x128xi8>,
    } else {
    }
    %c0_i32_2 = arith.constant 0 : i32
    %9 = arith.cmpi eq, %arg0, %c0_i32_2 : i32
    %10 = arith.extui %9 : i1 to i32
    %c0_i32_3 = arith.constant 0 : i32
    %11 = arith.cmpi ne, %10, %c0_i32_3 : i32
    scf.if %11 {
      %12 = tpu.iota {dimensions = array<i32: 0>} : vector<512x128xi32>
      %13 = tpu.iota {dimensions = array<i32: 1>} : vector<512x128xi32>
      %c65536_i32 = arith.constant 65536 : i32
      %14 = arith.muli %arg0, %c65536_i32 : i32
      %c128_i32 = arith.constant 128 : i32
      %15 = vector.broadcast %c128_i32 : i32 to vector<512x128xi32>
      %16 = arith.muli %12, %15 : vector<512x128xi32>
      %17 = vector.broadcast %14 : i32 to vector<512x128xi32>
      %18 = arith.addi %17, %16 : vector<512x128xi32>
      %19 = arith.addi %18, %13 : vector<512x128xi32>
      %c100_i32 = arith.constant 100 : i32
      %20 = vector.broadcast %c100_i32 : i32 to vector<512x128xi32>
      %21 = arith.cmpi slt, %19, %20 : vector<512x128xi32>
      %c0_i8 = arith.constant 0 : i8
      %22 = vector.broadcast %c0_i8 : i8 to vector<512x128xi8>
      %23 = arith.select %21, %5, %22 : vector<512x128xi1>, vector<512x128xi8>
      %c0_4 = arith.constant 0 : index
      %c0_5 = arith.constant 0 : index
      %24 = vector.load %arg2[%c0_4, %c0_5] : memref<512x128xi8, #tpu.memory_space<vmem>>, vector<512x128xi8>
      tpu.vector_store %arg2[%c0_4, %c0_5], %23 {strides = array<i32>} : memref<512x128xi8, #tpu.memory_space<vmem>>, vector<512x128xi8>,
    } else {
    }
    return
  }
  func.func @transform_0(%arg0: i32) -> (i32, i32) {
    %c0_i32 = arith.constant 0 : i32
    %c0_i32_0 = arith.constant 0 : i32
    return %arg0, %c0_i32 : i32, i32
  }
  func.func @transform_1(%arg0: i32) -> (i32, i32) {
    %c0_i32 = arith.constant 0 : i32
    %c0_i32_0 = arith.constant 0 : i32
    return %arg0, %c0_i32 : i32, i32
  }
}

</mosaic_0001>

<llo_original>
// kernel: tpu_custom_call.1
$region0: #{tpu_custom_call.1}
  #allocation0 [shape = 'u32[]', space=smem, size = 0x4, offset = 0x4, fixed_abs, tag = 'smem constant byte address 0x4 - core index']
  #allocation1 [shape = 'u32[144,128]{1,0:T(1,128)}', space=vmem, size = 0x12000, scoped, tag = 'internal scratch']
  %s0 = inlined_call_operand.hbm [shape: u32[512,128], index: 0, kind: input, shape index: {}]
  %s1 = inlined_call_operand.hbm [shape: s8[512,128], index: 1, kind: output, shape index: {}]
  %s2 = sld [smem:[#allocation0]]
  $region26: #{tpu_custom_call.1} parent=0
    _
  %s4 = ssub.s32 1, %s2
  %s5 = scalar_select 0, %s4, %s2
  $region1: #{tpu_custom_call.1} parent=0
    #allocation2 [shape = 'u8[262144]{0}', space=vmem, size = 0x40000, scoped, tag = 'input window, operand 0, single buffered']
    #allocation3 [shape = 's32[1]{0}', space=sflag, size = 0x4, scoped, tag = 'scoped memory for tpu_custom_call.1']
    #allocation4 [shape = 's32[1]{0}', space=sflag, size = 0x4, scoped, tag = 'scoped memory for tpu_custom_call.1']
    #allocation5 [shape = 'u8[65536]{0}', space=vmem, size = 0x10000, scoped, tag = 'output window, operand 0, single buffered']
    %6 = vsyncpa [#allocation3], 0
    %7 = vsyncpa [#allocation4], 0
    // Predicated region
    $region2: #{tpu_custom_call.1} parent=1 // pred_check
      _
    $region3: #{tpu_custom_call.1} parent=1 // pred_check_branch
      %9 = sbr.rel (0) target = $region5
    $region4: #{tpu_custom_call.1} parent=1 // pred_region
      %s11 = ssub.s32 8192, 8192
      %12 = vsyncadd [#allocation3], %s11
      %s13 = sshll.u32 [#allocation2], 4
      %s14 = int_to_ptr.vmem [resolvable:$true] %s13
      %19 = dma.hbm_to_vmem [thread:$0]  %s0, 8192, %s14, [#allocation3], 128, 128, 8
    $region5: #{tpu_custom_call.1} parent=1 // pred_fallthru
      _
    // Predicated region
    $region6: #{tpu_custom_call.1} parent=1 // pred_check
      _
    $region7: #{tpu_custom_call.1} parent=1 // pred_check_branch
      %21 = sbr.rel (0) target = $region9
    $region8: #{tpu_custom_call.1} parent=1 // pred_region
      %22 = dma.done [#allocation3], 8192
    $region9: #{tpu_custom_call.1} parent=1 // pred_fallthru
      _
    %v25 = vld [vmem:[#allocation2] sm:$0xff]
    %v26 = vld [vmem:[#allocation2 + $0x8] sm:$0xff]
    %v27 = vld [vmem:[#allocation2 + $0x10] sm:$0xff]
    %v28 = vld [vmem:[#allocation2 + $0x18] sm:$0xff]
    %v29 = vld [vmem:[#allocation2 + $0x20] sm:$0xff]
    %v30 = vld [vmem:[#allocation2 + $0x28] sm:$0xff]
    %v31 = vld [vmem:[#allocation2 + $0x30] sm:$0xff]
    %v32 = vld [vmem:[#allocation2 + $0x38] sm:$0xff]
    %v33 = vld [vmem:[#allocation2 + $0x40] sm:$0xff]
    %v34 = vld [vmem:[#allocation2 + $0x48] sm:$0xff]
    %v35 = vld [vmem:[#allocation2 + $0x50] sm:$0xff]
    %v36 = vld [vmem:[#allocation2 + $0x58] sm:$0xff]
    %v37 = vld [vmem:[#allocation2 + $0x60] sm:$0xff]
    %v38 = vld [vmem:[#allocation2 + $0x68] sm:$0xff]
    %v39 = vld [vmem:[#allocation2 + $0x70] sm:$0xff]
    %v40 = vld [vmem:[#allocation2 + $0x78] sm:$0xff]
    %v41 = vld [vmem:[#allocation2 + $0x80] sm:$0xff]
    %v42 = vld [vmem:[#allocation2 + $0x88] sm:$0xff]
    %v43 = vld [vmem:[#allocation2 + $0x90] sm:$0xff]
    %v44 = vld [vmem:[#allocation2 + $0x98] sm:$0xff]
    %v45 = vld [vmem:[#allocation2 + $0xa0] sm:$0xff]
    %v46 = vld [vmem:[#allocation2 + $0xa8] sm:$0xff]
    %v47 = vld [vmem:[#allocation2 + $0xb0] sm:$0xff]
    %v48 = vld [vmem:[#allocation2 + $0xb8] sm:$0xff]
    %v49 = vld [vmem:[#allocation2 + $0xc0] sm:$0xff]
    %v50 = vld [vmem:[#allocation2 + $0xc8] sm:$0xff]
    %v51 = vld [vmem:[#allocation2 + $0xd0] sm:$0xff]
    %v52 = vld [vmem:[#allocation2 + $0xd8] sm:$0xff]
    %v53 = vld [vmem:[#allocation2 + $0xe0] sm:$0xff]
    %v54 = vld [vmem:[#allocation2 + $0xe8] sm:$0xff]
    %v55 = vld [vmem:[#allocation2 + $0xf0] sm:$0xff]
    %v56 = vld [vmem:[#allocation2 + $0xf8] sm:$0xff]
    %v57 = vld [vmem:[#allocation2 + $0x100] sm:$0xff]
    %v58 = vld [vmem:[#allocation2 + $0x108] sm:$0xff]
    %v59 = vld [vmem:[#allocation2 + $0x110] sm:$0xff]
    %v60 = vld [vmem:[#allocation2 + $0x118] sm:$0xff]
    %v61 = vld [vmem:[#allocation2 + $0x120] sm:$0xff]
    %v62 = vld [vmem:[#allocation2 + $0x128] sm:$0xff]
    %v63 = vld [vmem:[#allocation2 + $0x130] sm:$0xff]
    %v64 = vld [vmem:[#allocation2 + $0x138] sm:$0xff]
    %v65 = vld [vmem:[#allocation2 + $0x140] sm:$0xff]
    %v66 = vld [vmem:[#allocation2 + $0x148] sm:$0xff]
    %v67 = vld [vmem:[#allocation2 + $0x150] sm:$0xff]
    %v68 = vld [vmem:[#allocation2 + $0x158] sm:$0xff]
    %v69 = vld [vmem:[#allocation2 + $0x160] sm:$0xff]
    %v70 = vld [vmem:[#allocation2 + $0x168] sm:$0xff]
    %v71 = vld [vmem:[#allocation2 + $0x170] sm:$0xff]
    %v72 = vld [vmem:[#allocation2 + $0x178] sm:$0xff]
    %v73 = vld [vmem:[#allocation2 + $0x180] sm:$0xff]
    %v74 = vld [vmem:[#allocation2 + $0x188] sm:$0xff]
    %v75 = vld [vmem:[#allocation2 + $0x190] sm:$0xff]
    %v76 = vld [vmem:[#allocation2 + $0x198] sm:$0xff]
    %v77 = vld [vmem:[#allocation2 + $0x1a0] sm:$0xff]
    %v78 = vld [vmem:[#allocation2 + $0x1a8] sm:$0xff]
    %v79 = vld [vmem:[#allocation2 + $0x1b0] sm:$0xff]
    %v80 = vld [vmem:[#allocation2 + $0x1b8] sm:$0xff]
    %v81 = vld [vmem:[#allocation2 + $0x1c0] sm:$0xff]
    %v82 = vld [vmem:[#allocation2 + $0x1c8] sm:$0xff]
    %v83 = vld [vmem:[#allocation2 + $0x1d0] sm:$0xff]
    %v84 = vld [vmem:[#allocation2 + $0x1d8] sm:$0xff]
    %v85 = vld [vmem:[#allocation2 + $0x1e0] sm:$0xff]
    %v86 = vld [vmem:[#allocation2 + $0x1e8] sm:$0xff]
    %v87 = vld [vmem:[#allocation2 + $0x1f0] sm:$0xff]
    %v88 = vld [vmem:[#allocation2 + $0x1f8] sm:$0xff]
    %v89 = vshrl.u32 %v25, 8
    %v90 = vshrl.u32 %v26, 8
    %v91 = vshrl.u32 %v27, 8
    %v92 = vshrl.u32 %v28, 8
    %v93 = vshrl.u32 %v29, 8
    %v94 = vshrl.u32 %v30, 8
    %v95 = vshrl.u32 %v31, 8
    %v96 = vshrl.u32 %v32, 8
    %v97 = vshrl.u32 %v33, 8
    %v98 = vshrl.u32 %v34, 8
    %v99 = vshrl.u32 %v35, 8
    %v100 = vshrl.u32 %v36, 8
    %v101 = vshrl.u32 %v37, 8
    %v102 = vshrl.u32 %v38, 8
    %v103 = vshrl.u32 %v39, 8
    %v104 = vshrl.u32 %v40, 8
    %v105 = vshrl.u32 %v41, 8
    %v106 = vshrl.u32 %v42, 8
    %v107 = vshrl.u32 %v43, 8
    %v108 = vshrl.u32 %v44, 8
    %v109 = vshrl.u32 %v45, 8
    %v110 = vshrl.u32 %v46, 8
    %v111 = vshrl.u32 %v47, 8
    %v112 = vshrl.u32 %v48, 8
    %v113 = vshrl.u32 %v49, 8
    %v114 = vshrl.u32 %v50, 8
    %v115 = vshrl.u32 %v51, 8
    %v116 = vshrl.u32 %v52, 8
    %v117 = vshrl.u32 %v53, 8
    %v118 = vshrl.u32 %v54, 8
    %v119 = vshrl.u32 %v55, 8
    %v120 = vshrl.u32 %v56, 8
    %v121 = vshrl.u32 %v57, 8
    %v122 = vshrl.u32 %v58, 8
    %v123 = vshrl.u32 %v59, 8
    %v124 = vshrl.u32 %v60, 8
    %v125 = vshrl.u32 %v61, 8
    %v126 = vshrl.u32 %v62, 8
    %v127 = vshrl.u32 %v63, 8
    %v128 = vshrl.u32 %v64, 8
    %v129 = vshrl.u32 %v65, 8
    %v130 = vshrl.u32 %v66, 8
    %v131 = vshrl.u32 %v67, 8
    %v132 = vshrl.u32 %v68, 8
    %v133 = vshrl.u32 %v69, 8
    %v134 = vshrl.u32 %v70, 8
    %v135 = vshrl.u32 %v71, 8
    %v136 = vshrl.u32 %v72, 8
    %v137 = vshrl.u32 %v73, 8
    %v138 = vshrl.u32 %v74, 8
    %v139 = vshrl.u32 %v75, 8
    %v140 = vshrl.u32 %v76, 8
    %v141 = vshrl.u32 %v77, 8
    %v142 = vshrl.u32 %v78, 8
    %v143 = vshrl.u32 %v79, 8
    %v144 = vshrl.u32 %v80, 8
    %v145 = vshrl.u32 %v81, 8
    %v146 = vshrl.u32 %v82, 8
    %v147 = vshrl.u32 %v83, 8
    %v148 = vshrl.u32 %v84, 8
    %v149 = vshrl.u32 %v85, 8
    %v150 = vshrl.u32 %v86, 8
    %v151 = vshrl.u32 %v87, 8
    %v152 = vshrl.u32 %v88, 8
    %vm153 = vcmp.lt.s32.totalorder %v89, 11744051
    %vm154 = vcmp.lt.s32.totalorder %v90, 11744051
    %vm155 = vcmp.lt.s32.totalorder %v91, 11744051
    %vm156 = vcmp.lt.s32.totalorder %v92, 11744051
    %vm157 = vcmp.lt.s32.totalorder %v93, 11744051
    %vm158 = vcmp.lt.s32.totalorder %v94, 11744051
    %vm159 = vcmp.lt.s32.totalorder %v95, 11744051
    %vm160 = vcmp.lt.s32.totalorder %v96, 11744051
    %vm161 = vcmp.lt.s32.totalorder %v97, 11744051
    %vm162 = vcmp.lt.s32.totalorder %v98, 11744051
    %vm163 = vcmp.lt.s32.totalorder %v99, 11744051
    %vm164 = vcmp.lt.s32.totalorder %v100, 11744051
    %vm165 = vcmp.lt.s32.totalorder %v101, 11744051
    %vm166 = vcmp.lt.s32.totalorder %v102, 11744051
    %vm167 = vcmp.lt.s32.totalorder %v103, 11744051
    %vm168 = vcmp.lt.s32.totalorder %v104, 11744051
    %vm169 = vcmp.lt.s32.totalorder %v105, 11744051
    %vm170 = vcmp.lt.s32.totalorder %v106, 11744051
    %vm171 = vcmp.lt.s32.totalorder %v107, 11744051
    %vm172 = vcmp.lt.s32.totalorder %v108, 11744051
    %vm173 = vcmp.lt.s32.totalorder %v109, 11744051
    %vm174 = vcmp.lt.s32.totalorder %v110, 11744051
    %vm175 = vcmp.lt.s32.totalorder %v111, 11744051
    %vm176 = vcmp.lt.s32.totalorder %v112, 11744051
    %vm177 = vcmp.lt.s32.totalorder %v113, 11744051
    %vm178 = vcmp.lt.s32.totalorder %v114, 11744051
    %vm179 = vcmp.lt.s32.totalorder %v115, 11744051
    %vm180 = vcmp.lt.s32.totalorder %v116, 11744051
    %vm181 = vcmp.lt.s32.totalorder %v117, 11744051
    %vm182 = vcmp.lt.s32.totalorder %v118, 11744051
    %vm183 = vcmp.lt.s32.totalorder %v119, 11744051
    %vm184 = vcmp.lt.s32.totalorder %v120, 11744051
    %vm185 = vcmp.lt.s32.totalorder %v121, 11744051
    %vm186 = vcmp.lt.s32.totalorder %v122, 11744051
    %vm187 = vcmp.lt.s32.totalorder %v123, 11744051
    %vm188 = vcmp.lt.s32.totalorder %v124, 11744051
    %vm189 = vcmp.lt.s32.totalorder %v125, 11744051
    %vm190 = vcmp.lt.s32.totalorder %v126, 11744051
    %vm191 = vcmp.lt.s32.totalorder %v127, 11744051
    %vm192 = vcmp.lt.s32.totalorder %v128, 11744051
    %vm193 = vcmp.lt.s32.totalorder %v129, 11744051
    %vm194 = vcmp.lt.s32.totalorder %v130, 11744051
    %vm195 = vcmp.lt.s32.totalorder %v131, 11744051
    %vm196 = vcmp.lt.s32.totalorder %v132, 11744051
    %vm197 = vcmp.lt.s32.totalorder %v133, 11744051
    %vm198 = vcmp.lt.s32.totalorder %v134, 11744051
    %vm199 = vcmp.lt.s32.totalorder %v135, 11744051
    %vm200 = vcmp.lt.s32.totalorder %v136, 11744051
    %vm201 = vcmp.lt.s32.totalorder %v137, 11744051
    %vm202 = vcmp.lt.s32.totalorder %v138, 11744051
    %vm203 = vcmp.lt.s32.totalorder %v139, 11744051
    %vm204 = vcmp.lt.s32.totalorder %v140, 11744051
    %vm205 = vcmp.lt.s32.totalorder %v141, 11744051
    %vm206 = vcmp.lt.s32.totalorder %v142, 11744051
    %vm207 = vcmp.lt.s32.totalorder %v143, 11744051
    %vm208 = vcmp.lt.s32.totalorder %v144, 11744051
    %vm209 = vcmp.lt.s32.totalorder %v145, 11744051
    %vm210 = vcmp.lt.s32.totalorder %v146, 11744051
    %vm211 = vcmp.lt.s32.totalorder %v147, 11744051
    %vm212 = vcmp.lt.s32.totalorder %v148, 11744051
    %vm213 = vcmp.lt.s32.totalorder %v149, 11744051
    %vm214 = vcmp.lt.s32.totalorder %v150, 11744051
    %vm215 = vcmp.lt.s32.totalorder %v151, 11744051
    %vm216 = vcmp.lt.s32.totalorder %v152, 11744051
    %vm217 = vmpackc.low %vm154, %vm153
    %vm218 = vmpackc.low %vm156, %vm155
    %vm219 = vmpackc.even %vm218, %vm217
    %vm220 = vmpackc.low %vm158, %vm157
    %vm221 = vmpackc.low %vm160, %vm159
    %vm222 = vmpackc.even %vm221, %vm220
    %vm223 = vmpackc.low %vm162, %vm161
    %vm224 = vmpackc.low %vm164, %vm163
    %vm225 = vmpackc.even %vm224, %vm223
    %vm226 = vmpackc.low %vm166, %vm165
    %vm227 = vmpackc.low %vm168, %vm167
    %vm228 = vmpackc.even %vm227, %vm226
    %vm229 = vmpackc.low %vm170, %vm169
    %vm230 = vmpackc.low %vm172, %vm171
    %vm231 = vmpackc.even %vm230, %vm229
    %vm232 = vmpackc.low %vm174, %vm173
    %vm233 = vmpackc.low %vm176, %vm175
    %vm234 = vmpackc.even %vm233, %vm232
    %vm235 = vmpackc.low %vm178, %vm177
    %vm236 = vmpackc.low %vm180, %vm179
    %vm237 = vmpackc.even %vm236, %vm235
    %vm238 = vmpackc.low %vm182, %vm181
    %vm239 = vmpackc.low %vm184, %vm183
    %vm240 = vmpackc.even %vm239, %vm238
    %vm241 = vmpackc.low %vm186, %vm185
    %vm242 = vmpackc.low %vm188, %vm187
    %vm243 = vmpackc.even %vm242, %vm241
    %vm244 = vmpackc.low %vm190, %vm189
    %vm245 = vmpackc.low %vm192, %vm191
    %vm246 = vmpackc.even %vm245, %vm244
    %vm247 = vmpackc.low %vm194, %vm193
    %vm248 = vmpackc.low %vm196, %vm195
    %vm249 = vmpackc.even %vm248, %vm247
    %vm250 = vmpackc.low %vm198, %vm197
    %vm251 = vmpackc.low %vm200, %vm199
    %vm252 = vmpackc.even %vm251, %vm250
    %vm253 = vmpackc.low %vm202, %vm201
    %vm254 = vmpackc.low %vm204, %vm203
    %vm255 = vmpackc.even %vm254, %vm253
    %vm256 = vmpackc.low %vm206, %vm205
    %vm257 = vmpackc.low %vm208, %vm207
    %vm258 = vmpackc.even %vm257, %vm256
    %vm259 = vmpackc.low %vm210, %vm209
    %vm260 = vmpackc.low %vm212, %vm211
    %vm261 = vmpackc.even %vm260, %vm259
    %vm262 = vmpackc.low %vm214, %vm213
    %vm263 = vmpackc.low %vm216, %vm215
    %vm264 = vmpackc.even %vm263, %vm262
    %v265 = vsel %vm219, 16843009, 0
    %v266 = vsel %vm222, 16843009, 0
    %v267 = vsel %vm225, 16843009, 0
    %v268 = vsel %vm228, 16843009, 0
    %v269 = vsel %vm231, 16843009, 0
    %v270 = vsel %vm234, 16843009, 0
    %v271 = vsel %vm237, 16843009, 0
    %v272 = vsel %vm240, 16843009, 0
    %v273 = vsel %vm243, 16843009, 0
    %v274 = vsel %vm246, 16843009, 0
    %v275 = vsel %vm249, 16843009, 0
    %v276 = vsel %vm252, 16843009, 0
    %v277 = vsel %vm255, 16843009, 0
    %v278 = vsel %vm258, 16843009, 0
    %v279 = vsel %vm261, 16843009, 0
    %v280 = vsel %vm264, 16843009, 0
    %p281 = scmp.ne.s32.totalorder 0, 0
    // Predicated region
    $region10: #{tpu_custom_call.1} parent=1 // pred_check
      %p282 = pneg %p281
    $region11: #{tpu_custom_call.1} parent=1 // pred_check_branch
      %284 = sbr.rel (%p282) target = $region13
    $region12: #{tpu_custom_call.1} parent=1 // pred_region
      %285 = vst [vmem:[#allocation5] sm:$0xff] %v265
      %286 = vst [vmem:[#allocation5 + $0x8] sm:$0xff] %v266
      %287 = vst [vmem:[#allocation5 + $0x10] sm:$0xff] %v267
      %288 = vst [vmem:[#allocation5 + $0x18] sm:$0xff] %v268
      %289 = vst [vmem:[#allocation5 + $0x20] sm:$0xff] %v269
      %290 = vst [vmem:[#allocation5 + $0x28] sm:$0xff] %v270
      %291 = vst [vmem:[#allocation5 + $0x30] sm:$0xff] %v271
      %292 = vst [vmem:[#allocation5 + $0x38] sm:$0xff] %v272
      %293 = vst [vmem:[#allocation5 + $0x40] sm:$0xff] %v273
      %294 = vst [vmem:[#allocation5 + $0x48] sm:$0xff] %v274
      %295 = vst [vmem:[#allocation5 + $0x50] sm:$0xff] %v275
      %296 = vst [vmem:[#allocation5 + $0x58] sm:$0xff] %v276
      %297 = vst [vmem:[#allocation5 + $0x60] sm:$0xff] %v277
      %298 = vst [vmem:[#allocation5 + $0x68] sm:$0xff] %v278
      %299 = vst [vmem:[#allocation5 + $0x70] sm:$0xff] %v279
      %300 = vst [vmem:[#allocation5 + $0x78] sm:$0xff] %v280
    $region13: #{tpu_custom_call.1} parent=1 // pred_fallthru
      _
    %p301 = scmp.eq.s32.totalorder 0, 0
    // Predicated region
    $region14: #{tpu_custom_call.1} parent=1 // pred_check
      %p302 = pneg %p301
    $region15: #{tpu_custom_call.1} parent=1 // pred_check_branch
      %304 = sbr.rel (%p302) target = $region17
    $region16: #{tpu_custom_call.1} parent=1 // pred_region
      %v305 = vlaneseq
      %v306 = vshrl.u32 %v305, 7
      %v307 = vadd.s32 %v306, 8
      %v308 = vadd.s32 %v306, 16
      %v309 = vadd.s32 %v306, 24
      %v310 = vadd.s32 %v306, 32
      %v311 = vadd.s32 %v306, 40
      %v312 = vadd.s32 %v306, 48
      %v313 = vadd.s32 %v306, 56
      %v314 = vadd.s32 %v306, 64
      %v315 = vadd.s32 %v306, 72
      %v316 = vadd.s32 %v306, 80
      %v317 = vadd.s32 %v306, 88
      %v318 = vadd.s32 %v306, 96
      %v319 = vadd.s32 %v306, 104
      %v320 = vadd.s32 %v306, 112
      %v321 = vadd.s32 %v306, 120
      %v322 = vadd.s32 %v306, 128
      %v323 = vadd.s32 %v306, 136
      %v324 = vadd.s32 %v306, 144
      %v325 = vadd.s32 %v306, 152
      %v326 = vadd.s32 %v306, 160
      %v327 = vadd.s32 %v306, 168
      %v328 = vadd.s32 %v306, 176
      %v329 = vadd.s32 %v306, 184
      %v330 = vadd.s32 %v306, 192
      %v331 = vadd.s32 %v306, 200
      %v332 = vadd.s32 %v306, 208
      %v333 = vadd.s32 %v306, 216
      %v334 = vadd.s32 %v306, 224
      %v335 = vadd.s32 %v306, 232
      %v336 = vadd.s32 %v306, 240
      %v337 = vadd.s32 %v306, 248
      %v338 = vadd.s32 %v306, 256
      %v339 = vadd.s32 %v306, 264
      %v340 = vadd.s32 %v306, 272
      %v341 = vadd.s32 %v306, 280
      %v342 = vadd.s32 %v306, 288
      %v343 = vadd.s32 %v306, 296
      %v344 = vadd.s32 %v306, 304
      %v345 = vadd.s32 %v306, 312
      %v346 = vadd.s32 %v306, 320
      %v347 = vadd.s32 %v306, 328
      %v348 = vadd.s32 %v306, 336
      %v349 = vadd.s32 %v306, 344
      %v350 = vadd.s32 %v306, 352
      %v351 = vadd.s32 %v306, 360
      %v352 = vadd.s32 %v306, 368
      %v353 = vadd.s32 %v306, 376
      %v354 = vadd.s32 %v306, 384
      %v355 = vadd.s32 %v306, 392
      %v356 = vadd.s32 %v306, 400
      %v357 = vadd.s32 %v306, 408
      %v358 = vadd.s32 %v306, 416
      %v359 = vadd.s32 %v306, 424
      %v360 = vadd.s32 %v306, 432
      %v361 = vadd.s32 %v306, 440
      %v362 = vadd.s32 %v306, 448
      %v363 = vadd.s32 %v306, 456
      %v364 = vadd.s32 %v306, 464
      %v365 = vadd.s32 %v306, 472
      %v366 = vadd.s32 %v306, 480
      %v367 = vadd.s32 %v306, 488
      %v368 = vadd.s32 %v306, 496
      %v369 = vadd.s32 %v306, 504
      %v370 = vlaneseq
      %v371 = vand.u32 %v370, 127
      %s372 = smul.u32 0, 65536
      %v373 = vmul.u32 %v306, 128
      %v374 = vmul.u32 %v307, 128
      %v375 = vmul.u32 %v308, 128
      %v376 = vmul.u32 %v309, 128
      %v377 = vmul.u32 %v310, 128
      %v378 = vmul.u32 %v311, 128
      %v379 = vmul.u32 %v312, 128
      %v380 = vmul.u32 %v313, 128
      %v381 = vmul.u32 %v314, 128
      %v382 = vmul.u32 %v315, 128
      %v383 = vmul.u32 %v316, 128
      %v384 = vmul.u32 %v317, 128
      %v385 = vmul.u32 %v318, 128
      %v386 = vmul.u32 %v319, 128
      %v387 = vmul.u32 %v320, 128
      %v388 = vmul.u32 %v321, 128
      %v389 = vmul.u32 %v322, 128
      %v390 = vmul.u32 %v323, 128
      %v391 = vmul.u32 %v324, 128
      %v392 = vmul.u32 %v325, 128
      %v393 = vmul.u32 %v326, 128
      %v394 = vmul.u32 %v327, 128
      %v395 = vmul.u32 %v328, 128
      %v396 = vmul.u32 %v329, 128
      %v397 = vmul.u32 %v330, 128
      %v398 = vmul.u32 %v331, 128
      %v399 = vmul.u32 %v332, 128
      %v400 = vmul.u32 %v333, 128
      %v401 = vmul.u32 %v334, 128
      %v402 = vmul.u32 %v335, 128
      %v403 = vmul.u32 %v336, 128
      %v404 = vmul.u32 %v337, 128
      %v405 = vmul.u32 %v338, 128
      %v406 = vmul.u32 %v339, 128
      %v407 = vmul.u32 %v340, 128
      %v408 = vmul.u32 %v341, 128
      %v409 = vmul.u32 %v342, 128
      %v410 = vmul.u32 %v343, 128
      %v411 = vmul.u32 %v344, 128
      %v412 = vmul.u32 %v345, 128
      %v413 = vmul.u32 %v346, 128
      %v414 = vmul.u32 %v347, 128
      %v415 = vmul.u32 %v348, 128
      %v416 = vmul.u32 %v349, 128
      %v417 = vmul.u32 %v350, 128
      %v418 = vmul.u32 %v351, 128
      %v419 = vmul.u32 %v352, 128
      %v420 = vmul.u32 %v353, 128
      %v421 = vmul.u32 %v354, 128
      %v422 = vmul.u32 %v355, 128
      %v423 = vmul.u32 %v356, 128
      %v424 = vmul.u32 %v357, 128
      %v425 = vmul.u32 %v358, 128
      %v426 = vmul.u32 %v359, 128
      %v427 = vmul.u32 %v360, 128
      %v428 = vmul.u32 %v361, 128
      %v429 = vmul.u32 %v362, 128
      %v430 = vmul.u32 %v363, 128
      %v431 = vmul.u32 %v364, 128
      %v432 = vmul.u32 %v365, 128
      %v433 = vmul.u32 %v366, 128
      %v434 = vmul.u32 %v367, 128
      %v435 = vmul.u32 %v368, 128
      %v436 = vmul.u32 %v369, 128
      %v437 = vstv %s372
      %v438 = vadd.s32 %v437, %v373
      %v439 = vadd.s32 %v437, %v374
      %v440 = vadd.s32 %v437, %v375
      %v441 = vadd.s32 %v437, %v376
      %v442 = vadd.s32 %v437, %v377
      %v443 = vadd.s32 %v437, %v378
      %v444 = vadd.s32 %v437, %v379
      %v445 = vadd.s32 %v437, %v380
      %v446 = vadd.s32 %v437, %v381
      %v447 = vadd.s32 %v437, %v382
      %v448 = vadd.s32 %v437, %v383
      %v449 = vadd.s32 %v437, %v384
      %v450 = vadd.s32 %v437, %v385
      %v451 = vadd.s32 %v437, %v386
      %v452 = vadd.s32 %v437, %v387
      %v453 = vadd.s32 %v437, %v388
      %v454 = vadd.s32 %v437, %v389
      %v455 = vadd.s32 %v437, %v390
      %v456 = vadd.s32 %v437, %v391
      %v457 = vadd.s32 %v437, %v392
      %v458 = vadd.s32 %v437, %v393
      %v459 = vadd.s32 %v437, %v394
      %v460 = vadd.s32 %v437, %v395
      %v461 = vadd.s32 %v437, %v396
      %v462 = vadd.s32 %v437, %v397
      %v463 = vadd.s32 %v437, %v398
      %v464 = vadd.s32 %v437, %v399
      %v465 = vadd.s32 %v437, %v400
      %v466 = vadd.s32 %v437, %v401
      %v467 = vadd.s32 %v437, %v402
      %v468 = vadd.s32 %v437, %v403
      %v469 = vadd.s32 %v437, %v404
      %v470 = vadd.s32 %v437, %v405
      %v471 = vadd.s32 %v437, %v406
      %v472 = vadd.s32 %v437, %v407
      %v473 = vadd.s32 %v437, %v408
      %v474 = vadd.s32 %v437, %v409
      %v475 = vadd.s32 %v437, %v410
      %v476 = vadd.s32 %v437, %v411
      %v477 = vadd.s32 %v437, %v412
      %v478 = vadd.s32 %v437, %v413
      %v479 = vadd.s32 %v437, %v414
      %v480 = vadd.s32 %v437, %v415
      %v481 = vadd.s32 %v437, %v416
      %v482 = vadd.s32 %v437, %v417
      %v483 = vadd.s32 %v437, %v418
      %v484 = vadd.s32 %v437, %v419
      %v485 = vadd.s32 %v437, %v420
      %v486 = vadd.s32 %v437, %v421
      %v487 = vadd.s32 %v437, %v422
      %v488 = vadd.s32 %v437, %v423
      %v489 = vadd.s32 %v437, %v424
      %v490 = vadd.s32 %v437, %v425
      %v491 = vadd.s32 %v437, %v426
      %v492 = vadd.s32 %v437, %v427
      %v493 = vadd.s32 %v437, %v428
      %v494 = vadd.s32 %v437, %v429
      %v495 = vadd.s32 %v437, %v430
      %v496 = vadd.s32 %v437, %v431
      %v497 = vadd.s32 %v437, %v432
      %v498 = vadd.s32 %v437, %v433
      %v499 = vadd.s32 %v437, %v434
      %v500 = vadd.s32 %v437, %v435
      %v501 = vadd.s32 %v437, %v436
      %v502 = vadd.s32 %v438, %v371
      %v503 = vadd.s32 %v439, %v371
      %v504 = vadd.s32 %v440, %v371
      %v505 = vadd.s32 %v441, %v371
      %v506 = vadd.s32 %v442, %v371
      %v507 = vadd.s32 %v443, %v371
      %v508 = vadd.s32 %v444, %v371
      %v509 = vadd.s32 %v445, %v371
      %v510 = vadd.s32 %v446, %v371
      %v511 = vadd.s32 %v447, %v371
      %v512 = vadd.s32 %v448, %v371
      %v513 = vadd.s32 %v449, %v371
      %v514 = vadd.s32 %v450, %v371
      %v515 = vadd.s32 %v451, %v371
      %v516 = vadd.s32 %v452, %v371
      %v517 = vadd.s32 %v453, %v371
      %v518 = vadd.s32 %v454, %v371
      %v519 = vadd.s32 %v455, %v371
      %v520 = vadd.s32 %v456, %v371
      %v521 = vadd.s32 %v457, %v371
      %v522 = vadd.s32 %v458, %v371
      %v523 = vadd.s32 %v459, %v371
      %v524 = vadd.s32 %v460, %v371
      %v525 = vadd.s32 %v461, %v371
      %v526 = vadd.s32 %v462, %v371
      %v527 = vadd.s32 %v463, %v371
      %v528 = vadd.s32 %v464, %v371
      %v529 = vadd.s32 %v465, %v371
      %v530 = vadd.s32 %v466, %v371
      %v531 = vadd.s32 %v467, %v371
      %v532 = vadd.s32 %v468, %v371
      %v533 = vadd.s32 %v469, %v371
      %v534 = vadd.s32 %v470, %v371
      %v535 = vadd.s32 %v471, %v371
      %v536 = vadd.s32 %v472, %v371
      %v537 = vadd.s32 %v473, %v371
      %v538 = vadd.s32 %v474, %v371
      %v539 = vadd.s32 %v475, %v371
      %v540 = vadd.s32 %v476, %v371
      %v541 = vadd.s32 %v477, %v371
      %v542 = vadd.s32 %v478, %v371
      %v543 = vadd.s32 %v479, %v371
      %v544 = vadd.s32 %v480, %v371
      %v545 = vadd.s32 %v481, %v371
      %v546 = vadd.s32 %v482, %v371
      %v547 = vadd.s32 %v483, %v371
      %v548 = vadd.s32 %v484, %v371
      %v549 = vadd.s32 %v485, %v371
      %v550 = vadd.s32 %v486, %v371
      %v551 = vadd.s32 %v487, %v371
      %v552 = vadd.s32 %v488, %v371
      %v553 = vadd.s32 %v489, %v371
      %v554 = vadd.s32 %v490, %v371
      %v555 = vadd.s32 %v491, %v371
      %v556 = vadd.s32 %v492, %v371
      %v557 = vadd.s32 %v493, %v371
      %v558 = vadd.s32 %v494, %v371
      %v559 = vadd.s32 %v495, %v371
      %v560 = vadd.s32 %v496, %v371
      %v561 = vadd.s32 %v497, %v371
      %v562 = vadd.s32 %v498, %v371
      %v563 = vadd.s32 %v499, %v371
      %v564 = vadd.s32 %v500, %v371
      %v565 = vadd.s32 %v501, %v371
      %vm566 = vcmp.lt.s32.totalorder %v502, 100
      %vm567 = vcmp.lt.s32.totalorder %v503, 100
      %vm568 = vcmp.lt.s32.totalorder %v504, 100
      %vm569 = vcmp.lt.s32.totalorder %v505, 100
      %vm570 = vcmp.lt.s32.totalorder %v506, 100
      %vm571 = vcmp.lt.s32.totalorder %v507, 100
      %vm572 = vcmp.lt.s32.totalorder %v508, 100
      %vm573 = vcmp.lt.s32.totalorder %v509, 100
      %vm574 = vcmp.lt.s32.totalorder %v510, 100
      %vm575 = vcmp.lt.s32.totalorder %v511, 100
      %vm576 = vcmp.lt.s32.totalorder %v512, 100
      %vm577 = vcmp.lt.s32.totalorder %v513, 100
      %vm578 = vcmp.lt.s32.totalorder %v514, 100
      %vm579 = vcmp.lt.s32.totalorder %v515, 100
      %vm580 = vcmp.lt.s32.totalorder %v516, 100
      %vm581 = vcmp.lt.s32.totalorder %v517, 100
      %vm582 = vcmp.lt.s32.totalorder %v518, 100
      %vm583 = vcmp.lt.s32.totalorder %v519, 100
      %vm584 = vcmp.lt.s32.totalorder %v520, 100
      %vm585 = vcmp.lt.s32.totalorder %v521, 100
      %vm586 = vcmp.lt.s32.totalorder %v522, 100
      %vm587 = vcmp.lt.s32.totalorder %v523, 100
      %vm588 = vcmp.lt.s32.totalorder %v524, 100
      %vm589 = vcmp.lt.s32.totalorder %v525, 100
      %vm590 = vcmp.lt.s32.totalorder %v526, 100
      %vm591 = vcmp.lt.s32.totalorder %v527, 100
      %vm592 = vcmp.lt.s32.totalorder %v528, 100
      %vm593 = vcmp.lt.s32.totalorder %v529, 100
      %vm594 = vcmp.lt.s32.totalorder %v530, 100
      %vm595 = vcmp.lt.s32.totalorder %v531, 100
      %vm596 = vcmp.lt.s32.totalorder %v532, 100
      %vm597 = vcmp.lt.s32.totalorder %v533, 100
      %vm598 = vcmp.lt.s32.totalorder %v534, 100
      %vm599 = vcmp.lt.s32.totalorder %v535, 100
      %vm600 = vcmp.lt.s32.totalorder %v536, 100
      %vm601 = vcmp.lt.s32.totalorder %v537, 100
      %vm602 = vcmp.lt.s32.totalorder %v538, 100
      %vm603 = vcmp.lt.s32.totalorder %v539, 100
      %vm604 = vcmp.lt.s32.totalorder %v540, 100
      %vm605 = vcmp.lt.s32.totalorder %v541, 100
      %vm606 = vcmp.lt.s32.totalorder %v542, 100
      %vm607 = vcmp.lt.s32.totalorder %v543, 100
      %vm608 = vcmp.lt.s32.totalorder %v544, 100
      %vm609 = vcmp.lt.s32.totalorder %v545, 100
      %vm610 = vcmp.lt.s32.totalorder %v546, 100
      %vm611 = vcmp.lt.s32.totalorder %v547, 100
      %vm612 = vcmp.lt.s32.totalorder %v548, 100
      %vm613 = vcmp.lt.s32.totalorder %v549, 100
      %vm614 = vcmp.lt.s32.totalorder %v550, 100
      %vm615 = vcmp.lt.s32.totalorder %v551, 100
      %vm616 = vcmp.lt.s32.totalorder %v552, 100
      %vm617 = vcmp.lt.s32.totalorder %v553, 100
      %vm618 = vcmp.lt.s32.totalorder %v554, 100
      %vm619 = vcmp.lt.s32.totalorder %v555, 100
      %vm620 = vcmp.lt.s32.totalorder %v556, 100
      %vm621 = vcmp.lt.s32.totalorder %v557, 100
      %vm622 = vcmp.lt.s32.totalorder %v558, 100
      %vm623 = vcmp.lt.s32.totalorder %v559, 100
      %vm624 = vcmp.lt.s32.totalorder %v560, 100
      %vm625 = vcmp.lt.s32.totalorder %v561, 100
      %vm626 = vcmp.lt.s32.totalorder %v562, 100
      %vm627 = vcmp.lt.s32.totalorder %v563, 100
      %vm628 = vcmp.lt.s32.totalorder %v564, 100
      %vm629 = vcmp.lt.s32.totalorder %v565, 100
      %vm630 = vmpackc.low %vm567, %vm566
      %vm631 = vmpackc.low %vm569, %vm568
      %vm632 = vmpackc.even %vm631, %vm630
      %vm633 = vmpackc.low %vm571, %vm570
      %vm634 = vmpackc.low %vm573, %vm572
      %vm635 = vmpackc.even %vm634, %vm633
      %vm636 = vmpackc.low %vm575, %vm574
      %vm637 = vmpackc.low %vm577, %vm576
      %vm638 = vmpackc.even %vm637, %vm636
      %vm639 = vmpackc.low %vm579, %vm578
      %vm640 = vmpackc.low %vm581, %vm580
      %vm641 = vmpackc.even %vm640, %vm639
      %vm642 = vmpackc.low %vm583, %vm582
      %vm643 = vmpackc.low %vm585, %vm584
      %vm644 = vmpackc.even %vm643, %vm642
      %vm645 = vmpackc.low %vm587, %vm586
      %vm646 = vmpackc.low %vm589, %vm588
      %vm647 = vmpackc.even %vm646, %vm645
      %vm648 = vmpackc.low %vm591, %vm590
      %vm649 = vmpackc.low %vm593, %vm592
      %vm650 = vmpackc.even %vm649, %vm648
      %vm651 = vmpackc.low %vm595, %vm594
      %vm652 = vmpackc.low %vm597, %vm596
      %vm653 = vmpackc.even %vm652, %vm651
      %vm654 = vmpackc.low %vm599, %vm598
      %vm655 = vmpackc.low %vm601, %vm600
      %vm656 = vmpackc.even %vm655, %vm654
      %vm657 = vmpackc.low %vm603, %vm602
      %vm658 = vmpackc.low %vm605, %vm604
      %vm659 = vmpackc.even %vm658, %vm657
      %vm660 = vmpackc.low %vm607, %vm606
      %vm661 = vmpackc.low %vm609, %vm608
      %vm662 = vmpackc.even %vm661, %vm660
      %vm663 = vmpackc.low %vm611, %vm610
      %vm664 = vmpackc.low %vm613, %vm612
      %vm665 = vmpackc.even %vm664, %vm663
      %vm666 = vmpackc.low %vm615, %vm614
      %vm667 = vmpackc.low %vm617, %vm616
      %vm668 = vmpackc.even %vm667, %vm666
      %vm669 = vmpackc.low %vm619, %vm618
      %vm670 = vmpackc.low %vm621, %vm620
      %vm671 = vmpackc.even %vm670, %vm669
      %vm672 = vmpackc.low %vm623, %vm622
      %vm673 = vmpackc.low %vm625, %vm624
      %vm674 = vmpackc.even %vm673, %vm672
      %vm675 = vmpackc.low %vm627, %vm626
      %vm676 = vmpackc.low %vm629, %vm628
      %vm677 = vmpackc.even %vm676, %vm675
      %v678 = vsel %vm632, %v265, 0
      %v679 = vsel %vm635, %v266, 0
      %v680 = vsel %vm638, %v267, 0
      %v681 = vsel %vm641, %v268, 0
      %v682 = vsel %vm644, %v269, 0
      %v683 = vsel %vm647, %v270, 0
      %v684 = vsel %vm650, %v271, 0
      %v685 = vsel %vm653, %v272, 0
      %v686 = vsel %vm656, %v273, 0
      %v687 = vsel %vm659, %v274, 0
      %v688 = vsel %vm662, %v275, 0
      %v689 = vsel %vm665, %v276, 0
      %v690 = vsel %vm668, %v277, 0
      %v691 = vsel %vm671, %v278, 0
      %v692 = vsel %vm674, %v279, 0
      %v693 = vsel %vm677, %v280, 0
      %694 = vst [vmem:[#allocation5] sm:$0xff] %v678
      %695 = vst [vmem:[#allocation5 + $0x8] sm:$0xff] %v679
      %696 = vst [vmem:[#allocation5 + $0x10] sm:$0xff] %v680
      %697 = vst [vmem:[#allocation5 + $0x18] sm:$0xff] %v681
      %698 = vst [vmem:[#allocation5 + $0x20] sm:$0xff] %v682
      %699 = vst [vmem:[#allocation5 + $0x28] sm:$0xff] %v683
      %700 = vst [vmem:[#allocation5 + $0x30] sm:$0xff] %v684
      %701 = vst [vmem:[#allocation5 + $0x38] sm:$0xff] %v685
      %702 = vst [vmem:[#allocation5 + $0x40] sm:$0xff] %v686
      %703 = vst [vmem:[#allocation5 + $0x48] sm:$0xff] %v687
      %704 = vst [vmem:[#allocation5 + $0x50] sm:$0xff] %v688
      %705 = vst [vmem:[#allocation5 + $0x58] sm:$0xff] %v689
      %706 = vst [vmem:[#allocation5 + $0x60] sm:$0xff] %v690
      %707 = vst [vmem:[#allocation5 + $0x68] sm:$0xff] %v691
      %708 = vst [vmem:[#allocation5 + $0x70] sm:$0xff] %v692
      %709 = vst [vmem:[#allocation5 + $0x78] sm:$0xff] %v693
    $region17: #{tpu_custom_call.1} parent=1 // pred_fallthru
      _
    // Predicated region
    $region18: #{tpu_custom_call.1} parent=1 // pred_check
      _
    $region19: #{tpu_custom_call.1} parent=1 // pred_check_branch
      %711 = sbr.rel (0) target = $region21
    $region20: #{tpu_custom_call.1} parent=1 // pred_region
      %s713 = ssub.s32 2048, 2048
      %714 = vsyncadd [#allocation4], %s713
      %s715 = sshll.u32 [#allocation5], 4
      %s716 = int_to_ptr.vmem [resolvable:$true] %s715
      %721 = dma.vmem_to_hbm [thread:$0]  %s716, 2048, %s1, [#allocation4], 128, 128, 8
    $region21: #{tpu_custom_call.1} parent=1 // pred_fallthru
      _
    // Predicated region
    $region22: #{tpu_custom_call.1} parent=1 // pred_check
      _
    $region23: #{tpu_custom_call.1} parent=1 // pred_check_branch
      %723 = sbr.rel (0) target = $region25
    $region24: #{tpu_custom_call.1} parent=1 // pred_region
      %724 = dma.done [#allocation4], 2048
    $region25: #{tpu_custom_call.1} parent=1 // pred_fallthru
      _
    %725 = vsyncpa [#allocation3], 1
    %726 = vsyncpa [#allocation4], 1

</llo_original>
